<compile_context>
chip_gen: v7x
topology: tpu7x:2x2x1
jax: 0.10.0
libtpu: 0.0.40
codegen_flags: <defaults>
</compile_context>

<pallas_src>
from functools import partial

import numpy as np
import jax
import jax.numpy as jnp
from jax.experimental import pallas as pl
from jax.experimental.pallas import tpu as pltpu

NF = 8          # num_features implied by material_info_to_array: 1 + 3 + 3 + 1
MAX_TILE_B = 16 * 1024


# ----------------------------------------------------------------------------
# Pallas kernel: whole MLP hot path, transposed (features, TILE_B) dataflow.
# x slab rows: 0:24 front feats, 24:36 base feats, 36 const 1.0, 37 path id.
# ----------------------------------------------------------------------------
def simple_model_kernel(
    x_ref,                         # (38, T)  transport dtype (f32 or bf16)
    wa_ref,                        # (66, 38) fused first layers + bias col + pass-throughs
    wb_ref,                        # (64, 66) fused block-diag second layers + bias col
    wl1f_ref, wl1b_ref, bl1_ref,   # layer_1 split: (8,16), (8,16), (8,1)
    wl2_ref, bl2_ref,              # layer_2: (4,8), (4,1)
    wout_ref, bout_ref,            # layer_out: (1,4), (1,1)
    out_ref,                       # (1, T) f32
):
    # Fused first layers of sub_net_1/2/3/0 (+ folded biases), ReLU.
    # Row 64 of h1 = relu(path) = path, row 65 = relu(1.0) = 1.0 (bias carrier).
    h1 = jnp.maximum(
        jnp.dot(wa_ref[...], x_ref[...], preferred_element_type=jnp.float32),
        0.0)                                                     # (66, T)
    # Fused second layers (+ folded biases via the constant row).
    h2 = jnp.dot(wb_ref[...], h1, preferred_element_type=jnp.float32)   # (64, T)

    path = h1[64:65, :]                                          # (1, T), exact ints
    front = jnp.where(path == 1.0, h2[0:16, :],
                      jnp.where(path == 2.0, h2[16:32, :], h2[32:48, :]))  # (16, T)
    base = h2[48:64, :]                                          # (16, T)

    # layer_1 on concat(front, base): weights split so no in-kernel concat.
    h = (jnp.dot(wl1f_ref[...], front, preferred_element_type=jnp.float32)
         + jnp.dot(wl1b_ref[...], base, preferred_element_type=jnp.float32)
         + bl1_ref[...])
    h = jnp.maximum(h, 0.0)                                      # (8, T)  [Dropout = id]
    h = jnp.maximum(
        jnp.dot(wl2_ref[...], h, preferred_element_type=jnp.float32) + bl2_ref[...],
        0.0)                                                     # (4, T)  [Dropout = id]

    # Final (1,4)x(4,T) on the VPU: 4 broadcast mul-adds, no MXU epilogue push.
    w = wout_ref[...]                                            # (1, 4)
    out_ref[...] = (h[0:1, :] * w[0:1, 0:1] + h[1:2, :] * w[0:1, 1:2]
                    + h[2:3, :] * w[0:1, 2:3] + h[3:4, :] * w[0:1, 3:4]
                    + bout_ref[...])                             # (1, T)


# ----------------------------------------------------------------------------
# JIT-fused wrapper: input layout transform + pad, pallas_call, output slice.
# ----------------------------------------------------------------------------
@partial(jax.jit, static_argnames=("tile", "b_pad", "transport_dtype"))
def _simple_model_jit(packed, base_in, front_in, path_sel, *, tile, b_pad,
                      transport_dtype):
    B = base_in.shape[0]
    ones = jnp.ones((B, 1), jnp.float32)
    x = jnp.concatenate(
        [front_in.astype(jnp.float32), base_in.astype(jnp.float32),
         ones, path_sel.astype(jnp.float32)], axis=1)            # (B, 38)
    # One fused pass: cast -> transpose (batch onto lanes) -> pad to the grid.
    x = jnp.pad(x.astype(transport_dtype).T, ((0, 0), (0, b_pad - B)))  # (38, b_pad)

    wa = packed["WA"].astype(transport_dtype)                    # bf16 MXU path
    weights = (wa, packed["WB"], packed["WL1F"], packed["WL1B"], packed["BL1"],
               packed["WL2"], packed["BL2"], packed["WOUT"], packed["BOUT"])
    w_specs = [pl.BlockSpec(w.shape, lambda i: (0, 0)) for w in weights]

    F = x.shape[0]
    out = pl.pallas_call(
        simple_model_kernel,
        out_shape=jax.ShapeDtypeStruct((1, b_pad), jnp.float32),
        grid=(b_pad // tile,),
        in_specs=[pl.BlockSpec((F, tile), lambda i: (0, i))] + w_specs,
        out_specs=pl.BlockSpec((1, tile), lambda i: (0, i)),
        compiler_params=pltpu.CompilerParams(
            dimension_semantics=("parallel",),        # v7x: shard batch across TCs
            vmem_limit_bytes=48 * 1024 * 1024),
    )(x, *weights)
    return out[:, :B].T                                          # (B, 1)


def simple_model_forward(packed, base_in, front_in, path_sel, *, tile_b=8192,
                         transport_dtype=jnp.bfloat16):
    """base_in (B,12) f32, front_in (B,24) f32, path_sel (B,1) int32 -> (B,1) f32."""
    B = base_in.shape[0]
    lanes = 128
    b_round = pl.cdiv(B, lanes) * lanes
    cap = max(lanes, (min(int(tile_b), MAX_TILE_B) // lanes) * lanes)
    n_steps = pl.cdiv(b_round, cap)
    if n_steps == 1 and b_round >= 2 * lanes:
        n_steps = 2                      # >=2 grid steps so v7x's 2nd core gets work
    # Balance tiles across steps (minimal tail padding), multiple of 128 lanes.
    tile = pl.cdiv(pl.cdiv(b_round, n_steps), lanes) * lanes
    b_pad = pl.cdiv(B, tile) * tile
    return _simple_model_jit(packed, base_in, front_in, path_sel,
                             tile=tile, b_pad=b_pad,
                             transport_dtype=transport_dtype)


# ----------------------------------------------------------------------------
# Host-side weight packing (fused / transposed slabs, biases folded).
# ----------------------------------------------------------------------------
def pack_params(p):
    # WA: (66, 38).  Input cols: 0:24 front, 24:36 base, 36 const 1.0, 37 path.
    WA = jnp.zeros((66, 38), jnp.float32)
    WA = WA.at[0:16, 0:NF].set(p["w1a"].T)
    WA = WA.at[16:32, 0:2 * NF].set(p["w2a"].T)
    WA = WA.at[32:48, 0:3 * NF].set(p["w3a"].T)
    WA = WA.at[48:64, 24:36].set(p["w0a"].T)
    ba = jnp.concatenate([p["b1a"], p["b2a"], p["b3a"], p["b0a"]], axis=1).T  # (64,1)
    WA = WA.at[0:64, 36:37].set(ba)        # first-layer biases via the const row
    WA = WA.at[64, 37].set(1.0)            # path pass-through  -> h1[64] = path
    WA = WA.at[65, 36].set(1.0)            # const pass-through -> h1[65] = 1.0

    # WB: (64, 66) block-diagonal second layers; col 65 carries the biases.
    WB = jnp.zeros((64, 66), jnp.float32)
    WB = WB.at[0:16, 0:16].set(p["w1b"].T)
    WB = WB.at[16:32, 16:32].set(p["w2b"].T)
    WB = WB.at[32:48, 32:48].set(p["w3b"].T)
    WB = WB.at[48:64, 48:64].set(p["w0b"].T)
    bb = jnp.concatenate([p["b1b"], p["b2b"], p["b3b"], p["b0b"]], axis=1).T  # (64,1)
    WB = WB.at[:, 65:66].set(bb)

    WL1 = p["layer_1_w"].T                 # (8, 32): cols 0:16 front, 16:32 base
    return {
        "WA": WA, "WB": WB,
        "WL1F": WL1[:, :16], "WL1B": WL1[:, 16:], "BL1": p["layer_1_b"].T,
        "WL2": p["layer_2_w"].T, "BL2": p["layer_2_b"].T,
        "WOUT": p["layer_out_w"].T, "BOUT": p["layer_out_b"].T,
    }


# ----------------------------------------------------------------------------
# Parameter init + material_info_to_array + input assembly (host-side glue)
# ----------------------------------------------------------------------------
def init_linear(key, fan_in, fan_out):
    k1, k2 = jax.random.split(key)
    bound = 1.0 / np.sqrt(fan_in)
    w = jax.random.uniform(k1, (fan_in, fan_out), jnp.float32, -bound, bound)
    b = jax.random.uniform(k2, (1, fan_out), jnp.float32, -bound, bound)
    return w, b


def init_params(key):
    keys = jax.random.split(key, 12)
    p = {}
    p["w0a"], p["b0a"] = init_linear(keys[0], 12, 16)
    p["w0b"], p["b0b"] = init_linear(keys[1], 16, 16)
    p["w1a"], p["b1a"] = init_linear(keys[2], NF, 16)
    p["w1b"], p["b1b"] = init_linear(keys[3], 16, 16)
    p["w2a"], p["b2a"] = init_linear(keys[4], 2 * NF, 16)
    p["w2b"], p["b2b"] = init_linear(keys[5], 16, 16)
    p["w3a"], p["b3a"] = init_linear(keys[6], 3 * NF, 16)
    p["w3b"], p["b3b"] = init_linear(keys[7], 16, 16)
    p["layer_1_w"], p["layer_1_b"] = init_linear(keys[8], 32, 8)
    p["layer_2_w"], p["layer_2_b"] = init_linear(keys[9], 8, 4)
    p["layer_out_w"], p["layer_out_b"] = init_linear(keys[10], 4, 1)
    k_f, k_p = jax.random.split(keys[11])
    p["family_emb"] = jax.random.normal(k_f, (19, 3), jnp.float32)
    p["period_emb"] = jax.random.normal(k_p, (8, 3), jnp.float32)
    return p


def material_info_to_array(params, material):
    """material = (amount, family_idx, period_idx, electronegativity) -> (8,) feats."""
    amount, fam, per, elec = material
    na = jnp.array([(amount - 1.0) / (260.0 - 1.0)], jnp.float32)
    fe = params["family_emb"][fam]
    pe = params["period_emb"][per]
    ne = jnp.array([(elec - 0.9) / (2.8 - 0.9)], jnp.float32)
    return jnp.concatenate([na, fe, pe, ne])


def build_inputs(params, x):
    """x mirrors the PyTorch input tuple: (support, m1, m2_or_None, m3_or_None,
    temperature, pch4, po2, par) -> base_in (B,12), front_in (B,24), path (B,1)."""
    support, m1, m2, m3, temp, pch4, po2, par = x
    B = len(support)

    temp_n = (jnp.asarray(temp, jnp.float32) - 600.0) / (900.0 - 600.0)
    infos = jnp.stack(
        [temp_n, jnp.asarray(pch4, jnp.float32),
         jnp.asarray(po2, jnp.float32), jnp.asarray(par, jnp.float32)], axis=1)

    support_f = jnp.stack([material_info_to_array(params, m) for m in support])
    base_in = jnp.concatenate([support_f, infos], axis=1)          # (B, 12)

    front_rows, path_sel = [], []
    for i in range(B):
        f1 = material_info_to_array(params, m1[i])
        if m2[i] is None and m3[i] is None:
            row = jnp.concatenate([f1, jnp.zeros((2 * NF,), jnp.float32)])
            path_sel.append(1)
        elif m2[i] is not None and m3[i] is None:
            row = jnp.concatenate([f1, material_info_to_array(params, m2[i]),
                                   jnp.zeros((NF,), jnp.float32)])
            path_sel.append(2)
        else:
            row = jnp.concatenate([f1, material_info_to_array(params, m2[i]),
                                   material_info_to_array(params, m3[i])])
            path_sel.append(3)
        front_rows.append(row)
    front_in = jnp.stack(front_rows)                               # (B, 24)
    path_sel = jnp.asarray(path_sel, jnp.int32)[:, None]           # (B, 1)
    return base_in, front_in, path_sel


def reference_forward(params, base_in, front_in, path_sel):
    """Pure-JAX reference in the original (batch, features) layout."""
    def lin(x, w, b): return x @ w + b
    base = lin(jnp.maximum(lin(base_in, params["w0a"], params["b0a"]), 0.0),
               params["w0b"], params["b0b"])
    f1 = lin(jnp.maximum(lin(front_in[:, :NF], params["w1a"], params["b1a"]), 0.0),
             params["w1b"], params["b1b"])
    f2 = lin(jnp.maximum(lin(front_in[:, :2 * NF], params["w2a"], params["b2a"]), 0.0),
             params["w2b"], params["b2b"])
    f3 = lin(jnp.maximum(lin(front_in, params["w3a"], params["b3a"]), 0.0),
             params["w3b"], params["b3b"])
    front = jnp.where(path_sel == 1, f1, jnp.where(path_sel == 2, f2, f3))
    h = jnp.concatenate([front, base], axis=1)
    h = jnp.maximum(lin(h, params["layer_1_w"], params["layer_1_b"]), 0.0)
    h = jnp.maximum(lin(h, params["layer_2_w"], params["layer_2_b"]), 0.0)
    return lin(h, params["layer_out_w"], params["layer_out_b"])


if __name__ == "__main__":
    params = init_params(jax.random.PRNGKey(0))
    packed = pack_params(params)

    # ---- Test 1: small deterministic batch (B=4) through the material pipeline,
    # mixing all three per-sample paths; f32 transport for a tight check. ----
    support = [(10.0, 2, 3, 1.2), (50.0, 5, 1, 2.0), (100.0, 7, 4, 1.5), (200.0, 12, 6, 2.5)]
    m1      = [(20.0, 1, 2, 1.1), (60.0, 4, 3, 1.8), (120.0, 9, 5, 2.1), (240.0, 15, 7, 2.7)]
    m2      = [None,              (30.0, 3, 2, 1.4), (80.0, 6, 1, 1.9),  None]
    m3      = [None,              None,              (40.0, 8, 2, 1.0),  None]
    temperature = [700.0, 750.0, 800.0, 650.0]
    pch4 = [0.2, 0.4, 0.6, 0.8]
    po2  = [0.1, 0.2, 0.3, 0.4]
    par  = [0.7, 0.4, 0.1, 0.0]
    x = (support, m1, m2, m3, temperature, pch4, po2, par)

    base_in, front_in, path_sel = build_inputs(params, x)
    out = jax.block_until_ready(
        simple_model_forward(packed, base_in, front_in, path_sel,
                             transport_dtype=jnp.float32))
    ref = reference_forward(params, base_in, front_in, path_sel)
    np.testing.assert_allclose(np.asarray(out), np.asarray(ref), rtol=1e-5, atol=1e-5)

    # ---- Test 2: larger random batch (B=300, not a tile multiple) on the default
    # bf16-transport path: exercises the >=2-step grid and the tail padding. ----
    kb, kf, kp = jax.random.split(jax.random.PRNGKey(1), 3)
    B2 = 300
    base2 = jax.random.normal(kb, (B2, 12), jnp.float32)
    path2 = jax.random.randint(kp, (B2, 1), 1, 4, jnp.int32)
    front2 = jax.random.normal(kf, (B2, 3 * NF), jnp.float32)
    front2 = front2 * (jnp.arange(3 * NF)[None, :] < path2 * NF)   # zero missing materials
    out2 = jax.block_until_ready(simple_model_forward(packed, base2, front2, path2))
    ref2 = reference_forward(params, base2, front2, path2)
    np.testing.assert_allclose(np.asarray(out2), np.asarray(ref2), rtol=2e-2, atol=2e-2)

    print("KERNEL_OK")
</pallas_src>

<mosaic_0001>
module attributes {stable_mosaic.version = 11 : i64} {
  func.func @simple_model_kernel(%arg0: i32, %arg1: memref<38x128xf32, #tpu.memory_space<vmem>>, %arg2: memref<66x38xf32, #tpu.memory_space<vmem>>, %arg3: memref<64x66xf32, #tpu.memory_space<vmem>>, %arg4: memref<8x16xf32, #tpu.memory_space<vmem>>, %arg5: memref<8x16xf32, #tpu.memory_space<vmem>>, %arg6: memref<8x1xf32, #tpu.memory_space<vmem>>, %arg7: memref<4x8xf32, #tpu.memory_space<vmem>>, %arg8: memref<4x1xf32, #tpu.memory_space<vmem>>, %arg9: memref<1x4xf32, #tpu.memory_space<vmem>>, %arg10: memref<1x1xf32, #tpu.memory_space<vmem>>, %arg11: memref<1x128xf32, #tpu.memory_space<vmem>>) attributes {dimension_semantics = [#tpu.dimension_semantics<parallel>], iteration_bounds = array<i64: 1>, scalar_prefetch = 0 : i64, scratch_operands = 0 : i64, tpu.core_type = #tpu.core_type<tc>, window_params = [{transform_indices = @transform_0, window_bounds = array<i64: 38, 128>}, {pipeline_mode = #tpu.pipeline_mode<synchronous>, transform_indices = @transform_1, window_bounds = array<i64: 66, 38>}, {pipeline_mode = #tpu.pipeline_mode<synchronous>, transform_indices = @transform_2, window_bounds = array<i64: 64, 66>}, {pipeline_mode = #tpu.pipeline_mode<synchronous>, transform_indices = @transform_3, window_bounds = array<i64: 8, 16>}, {pipeline_mode = #tpu.pipeline_mode<synchronous>, transform_indices = @transform_4, window_bounds = array<i64: 8, 16>}, {pipeline_mode = #tpu.pipeline_mode<synchronous>, transform_indices = @transform_5, window_bounds = array<i64: 8, 1>}, {pipeline_mode = #tpu.pipeline_mode<synchronous>, transform_indices = @transform_6, window_bounds = array<i64: 4, 8>}, {pipeline_mode = #tpu.pipeline_mode<synchronous>, transform_indices = @transform_7, window_bounds = array<i64: 4, 1>}, {pipeline_mode = #tpu.pipeline_mode<synchronous>, transform_indices = @transform_8, window_bounds = array<i64: 1, 4>}, {pipeline_mode = #tpu.pipeline_mode<synchronous>, transform_indices = @transform_9, window_bounds = array<i64: 1, 1>}, {transform_indices = @transform_10, window_bounds = array<i64: 1, 128>}]} {
    %c0 = arith.constant 0 : index
    %c0_0 = arith.constant 0 : index
    %0 = vector.load %arg2[%c0, %c0_0] : memref<66x38xf32, #tpu.memory_space<vmem>>, vector<66x38xf32>
    %c0_1 = arith.constant 0 : index
    %c0_2 = arith.constant 0 : index
    %1 = vector.load %arg1[%c0_1, %c0_2] : memref<38x128xf32, #tpu.memory_space<vmem>>, vector<38x128xf32>
    %cst = arith.constant dense<0.000000e+00> : vector<66x128xf32>
    %2 = tpu.matmul %0, %1, %cst {dimension_numbers = #tpu.dot_dimension_numbers<[1], [0], [0], [1], [0, 0, 1, 1], [], []>} : vector<66x38xf32>, vector<38x128xf32>, vector<66x128xf32> -> vector<66x128xf32>
    %cst_3 = arith.constant 0.000000e+00 : f32
    %3 = vector.broadcast %cst_3 : f32 to vector<66x128xf32>
    %4 = arith.maximumf %2, %3 : vector<66x128xf32>
    %c0_4 = arith.constant 0 : index
    %c0_5 = arith.constant 0 : index
    %5 = vector.load %arg3[%c0_4, %c0_5] : memref<64x66xf32, #tpu.memory_space<vmem>>, vector<64x66xf32>
    %cst_6 = arith.constant dense<0.000000e+00> : vector<64x128xf32>
    %6 = tpu.matmul %5, %4, %cst_6 {dimension_numbers = #tpu.dot_dimension_numbers<[1], [0], [0], [1], [0, 0, 1, 1], [], []>} : vector<64x66xf32>, vector<66x128xf32>, vector<64x128xf32> -> vector<64x128xf32>
    %7 = vector.extract_strided_slice %4 {offsets = [64, 0], sizes = [1, 128], strides = [1, 1]} : vector<66x128xf32> to vector<1x128xf32>
    %cst_7 = arith.constant 1.000000e+00 : f32
    %8 = vector.broadcast %cst_7 : f32 to vector<1x128xf32>
    %9 = arith.cmpf oeq, %7, %8 : vector<1x128xf32>
    %10 = vector.extract_strided_slice %6 {offsets = [0, 0], sizes = [16, 128], strides = [1, 1]} : vector<64x128xf32> to vector<16x128xf32>
    %cst_8 = arith.constant 2.000000e+00 : f32
    %11 = vector.broadcast %cst_8 : f32 to vector<1x128xf32>
    %12 = arith.cmpf oeq, %7, %11 : vector<1x128xf32>
    %13 = vector.extract_strided_slice %6 {offsets = [16, 0], sizes = [16, 128], strides = [1, 1]} : vector<64x128xf32> to vector<16x128xf32>
    %14 = vector.extract_strided_slice %6 {offsets = [32, 0], sizes = [16, 128], strides = [1, 1]} : vector<64x128xf32> to vector<16x128xf32>
    %15 = vector.shape_cast %12 : vector<1x128xi1> to vector<1x128xi1>
    %16 = vector.broadcast %15 : vector<1x128xi1> to vector<16x128xi1>
    %17 = arith.select %16, %13, %14 : vector<16x128xi1>, vector<16x128xf32>
    %18 = vector.shape_cast %9 : vector<1x128xi1> to vector<1x128xi1>
    %19 = vector.broadcast %18 : vector<1x128xi1> to vector<16x128xi1>
    %20 = arith.select %19, %10, %17 : vector<16x128xi1>, vector<16x128xf32>
    %21 = vector.extract_strided_slice %6 {offsets = [48, 0], sizes = [16, 128], strides = [1, 1]} : vector<64x128xf32> to vector<16x128xf32>
    %c0_9 = arith.constant 0 : index
    %c0_10 = arith.constant 0 : index
    %22 = vector.load %arg4[%c0_9, %c0_10] : memref<8x16xf32, #tpu.memory_space<vmem>>, vector<8x16xf32>
    %cst_11 = arith.constant dense<0.000000e+00> : vector<8x128xf32>
    %23 = tpu.matmul %22, %20, %cst_11 {dimension_numbers = #tpu.dot_dimension_numbers<[1], [0], [0], [1], [0, 0, 1, 1], [], []>} : vector<8x16xf32>, vector<16x128xf32>, vector<8x128xf32> -> vector<8x128xf32>
    %c0_12 = arith.constant 0 : index
    %c0_13 = arith.constant 0 : index
    %24 = vector.load %arg5[%c0_12, %c0_13] : memref<8x16xf32, #tpu.memory_space<vmem>>, vector<8x16xf32>
    %cst_14 = arith.constant dense<0.000000e+00> : vector<8x128xf32>
    %25 = tpu.matmul %24, %21, %cst_14 {dimension_numbers = #tpu.dot_dimension_numbers<[1], [0], [0], [1], [0, 0, 1, 1], [], []>} : vector<8x16xf32>, vector<16x128xf32>, vector<8x128xf32> -> vector<8x128xf32>
    %26 = arith.addf %23, %25 : vector<8x128xf32>
    %c0_15 = arith.constant 0 : index
    %c0_16 = arith.constant 0 : index
    %27 = vector.load %arg6[%c0_15, %c0_16] : memref<8x1xf32, #tpu.memory_space<vmem>>, vector<8x1xf32>
    %28 = vector.broadcast %27 : vector<8x1xf32> to vector<8x128xf32>
    %29 = arith.addf %26, %28 : vector<8x128xf32>
    %cst_17 = arith.constant 0.000000e+00 : f32
    %30 = vector.broadcast %cst_17 : f32 to vector<8x128xf32>
    %31 = arith.maximumf %29, %30 : vector<8x128xf32>
    %c0_18 = arith.constant 0 : index
    %c0_19 = arith.constant 0 : index
    %32 = vector.load %arg7[%c0_18, %c0_19] : memref<4x8xf32, #tpu.memory_space<vmem>>, vector<4x8xf32>
    %cst_20 = arith.constant dense<0.000000e+00> : vector<4x128xf32>
    %33 = tpu.matmul %32, %31, %cst_20 {dimension_numbers = #tpu.dot_dimension_numbers<[1], [0], [0], [1], [0, 0, 1, 1], [], []>} : vector<4x8xf32>, vector<8x128xf32>, vector<4x128xf32> -> vector<4x128xf32>
    %c0_21 = arith.constant 0 : index
    %c0_22 = arith.constant 0 : index
    %34 = vector.load %arg8[%c0_21, %c0_22] : memref<4x1xf32, #tpu.memory_space<vmem>>, vector<4x1xf32>
    %35 = vector.broadcast %34 : vector<4x1xf32> to vector<4x128xf32>
    %36 = arith.addf %33, %35 : vector<4x128xf32>
    %cst_23 = arith.constant 0.000000e+00 : f32
    %37 = vector.broadcast %cst_23 : f32 to vector<4x128xf32>
    %38 = arith.maximumf %36, %37 : vector<4x128xf32>
    %c0_24 = arith.constant 0 : index
    %c0_25 = arith.constant 0 : index
    %39 = vector.load %arg9[%c0_24, %c0_25] : memref<1x4xf32, #tpu.memory_space<vmem>>, vector<1x4xf32>
    %40 = vector.extract_strided_slice %38 {offsets = [0, 0], sizes = [1, 128], strides = [1, 1]} : vector<4x128xf32> to vector<1x128xf32>
    %41 = vector.extract_strided_slice %39 {offsets = [0, 0], sizes = [1, 1], strides = [1, 1]} : vector<1x4xf32> to vector<1x1xf32>
    %42 = vector.broadcast %41 : vector<1x1xf32> to vector<1x128xf32>
    %43 = arith.mulf %40, %42 : vector<1x128xf32>
    %44 = vector.extract_strided_slice %38 {offsets = [1, 0], sizes = [1, 128], strides = [1, 1]} : vector<4x128xf32> to vector<1x128xf32>
    %45 = vector.extract_strided_slice %39 {offsets = [0, 1], sizes = [1, 1], strides = [1, 1]} : vector<1x4xf32> to vector<1x1xf32>
    %46 = vector.broadcast %45 : vector<1x1xf32> to vector<1x128xf32>
    %47 = arith.mulf %44, %46 : vector<1x128xf32>
    %48 = arith.addf %43, %47 : vector<1x128xf32>
    %49 = vector.extract_strided_slice %38 {offsets = [2, 0], sizes = [1, 128], strides = [1, 1]} : vector<4x128xf32> to vector<1x128xf32>
    %50 = vector.extract_strided_slice %39 {offsets = [0, 2], sizes = [1, 1], strides = [1, 1]} : vector<1x4xf32> to vector<1x1xf32>
    %51 = vector.broadcast %50 : vector<1x1xf32> to vector<1x128xf32>
    %52 = arith.mulf %49, %51 : vector<1x128xf32>
    %53 = arith.addf %48, %52 : vector<1x128xf32>
    %54 = vector.extract_strided_slice %38 {offsets = [3, 0], sizes = [1, 128], strides = [1, 1]} : vector<4x128xf32> to vector<1x128xf32>
    %55 = vector.extract_strided_slice %39 {offsets = [0, 3], sizes = [1, 1], strides = [1, 1]} : vector<1x4xf32> to vector<1x1xf32>
    %56 = vector.broadcast %55 : vector<1x1xf32> to vector<1x128xf32>
    %57 = arith.mulf %54, %56 : vector<1x128xf32>
    %58 = arith.addf %53, %57 : vector<1x128xf32>
    %c0_26 = arith.constant 0 : index
    %c0_27 = arith.constant 0 : index
    %59 = vector.load %arg10[%c0_26, %c0_27] : memref<1x1xf32, #tpu.memory_space<vmem>>, vector<1x1xf32>
    %60 = vector.broadcast %59 : vector<1x1xf32> to vector<1x128xf32>
    %61 = arith.addf %58, %60 : vector<1x128xf32>
    %c0_28 = arith.constant 0 : index
    %c0_29 = arith.constant 0 : index
    %62 = vector.load %arg11[%c0_28, %c0_29] : memref<1x128xf32, #tpu.memory_space<vmem>>, vector<1x128xf32>
    tpu.vector_store %arg11[%c0_28, %c0_29], %61 {strides = array<i32>} : memref<1x128xf32, #tpu.memory_space<vmem>>, vector<1x128xf32>,
    return
  }
  func.func @transform_0(%arg0: i32) -> (i32, i32) {
    %c0_i32 = arith.constant 0 : i32
    %c0_i32_0 = arith.constant 0 : i32
    return %c0_i32, %arg0 : i32, i32
  }
  func.func @transform_1(%arg0: i32) -> (i32, i32) {
    %c0_i32 = arith.constant 0 : i32
    %c0_i32_0 = arith.constant 0 : i32
    %c0_i32_1 = arith.constant 0 : i32
    return %c0_i32, %c0_i32_0 : i32, i32
  }
  func.func @transform_2(%arg0: i32) -> (i32, i32) {
    %c0_i32 = arith.constant 0 : i32
    %c0_i32_0 = arith.constant 0 : i32
    %c0_i32_1 = arith.constant 0 : i32
    return %c0_i32, %c0_i32_0 : i32, i32
  }
  func.func @transform_3(%arg0: i32) -> (i32, i32) {
    %c0_i32 = arith.constant 0 : i32
    %c0_i32_0 = arith.constant 0 : i32
    %c0_i32_1 = arith.constant 0 : i32
    return %c0_i32, %c0_i32_0 : i32, i32
  }
  func.func @transform_4(%arg0: i32) -> (i32, i32) {
    %c0_i32 = arith.constant 0 : i32
    %c0_i32_0 = arith.constant 0 : i32
    %c0_i32_1 = arith.constant 0 : i32
    return %c0_i32, %c0_i32_0 : i32, i32
  }
  func.func @transform_5(%arg0: i32) -> (i32, i32) {
    %c0_i32 = arith.constant 0 : i32
    %c0_i32_0 = arith.constant 0 : i32
    %c0_i32_1 = arith.constant 0 : i32
    return %c0_i32, %c0_i32_0 : i32, i32
  }
  func.func @transform_6(%arg0: i32) -> (i32, i32) {
    %c0_i32 = arith.constant 0 : i32
    %c0_i32_0 = arith.constant 0 : i32
    %c0_i32_1 = arith.constant 0 : i32
    return %c0_i32, %c0_i32_0 : i32, i32
  }
  func.func @transform_7(%arg0: i32) -> (i32, i32) {
    %c0_i32 = arith.constant 0 : i32
    %c0_i32_0 = arith.constant 0 : i32
    %c0_i32_1 = arith.constant 0 : i32
    return %c0_i32, %c0_i32_0 : i32, i32
  }
  func.func @transform_8(%arg0: i32) -> (i32, i32) {
    %c0_i32 = arith.constant 0 : i32
    %c0_i32_0 = arith.constant 0 : i32
    %c0_i32_1 = arith.constant 0 : i32
    return %c0_i32, %c0_i32_0 : i32, i32
  }
  func.func @transform_9(%arg0: i32) -> (i32, i32) {
    %c0_i32 = arith.constant 0 : i32
    %c0_i32_0 = arith.constant 0 : i32
    %c0_i32_1 = arith.constant 0 : i32
    return %c0_i32, %c0_i32_0 : i32, i32
  }
  func.func @transform_10(%arg0: i32) -> (i32, i32) {
    %c0_i32 = arith.constant 0 : i32
    %c0_i32_0 = arith.constant 0 : i32
    return %c0_i32, %arg0 : i32, i32
  }
}

</mosaic_0001>

<llo_original>
// kernel: _simple_model_jit.1
$region0: #{_simple_model_jit.1}
  #allocation0 [shape = 'u32[]', space=smem, size = 0x4, offset = 0x4, fixed_abs, tag = 'smem constant byte address 0x4 - core index']
  #allocation1 [shape = 'u32[144,128]{1,0:T(1,128)}', space=vmem, size = 0x12000, scoped, tag = 'internal scratch']
  #allocation2 [shape = 'f32[1,1]{1,0:T(1,128)S(1)}', space=vmem, size = 0x200, scoped, tag = 'scoped memory for _simple_model_jit.1']
  %s0 = inlined_call_operand.vmem [shape: f32[38,128], index: 0, kind: input, shape index: {}]
  %s1 = inlined_call_operand.vmem [shape: f32[66,38], index: 1, kind: input, shape index: {}]
  %s2 = inlined_call_operand.vmem [shape: f32[64,66], index: 2, kind: input, shape index: {}]
  %s3 = inlined_call_operand.vmem [shape: f32[8,16], index: 3, kind: input, shape index: {}]
  %s4 = inlined_call_operand.vmem [shape: f32[8,16], index: 4, kind: input, shape index: {}]
  %s5 = inlined_call_operand.vmem [shape: f32[8,1], index: 5, kind: input, shape index: {}]
  %s6 = inlined_call_operand.vmem [shape: f32[4,8], index: 6, kind: input, shape index: {}]
  %s7 = inlined_call_operand.vmem [shape: f32[4,1], index: 7, kind: input, shape index: {}]
  %s8 = inlined_call_operand.vmem [shape: f32[1,4], index: 8, kind: input, shape index: {}]
  %s9 = inlined_call_operand.<no memory space> [shape: f32[1,1], index: 9, kind: input, shape index: {}]
  %s10 = inlined_call_operand.vmem [shape: f32[1,128], index: 10, kind: output, shape index: {}]
  %s11 = sld [smem:[#allocation0]]
  $region50: #{_simple_model_jit.1} parent=0
    _
  %s13 = ssub.s32 1, %s11
  %s14 = scalar_select 0, %s13, %s11
  %v15 = vstv %s9
  %16 = vst [vmem:[#allocation2] sm:$0x1] %v15
  // Predicated region
  $region2: #{_simple_model_jit.1} parent=0 // pred_check
    _
  $region3: #{_simple_model_jit.1} parent=0 // pred_check_branch
    %18 = sbr.rel (0) target = $region5
  $region4: #{_simple_model_jit.1} parent=0 // pred_region
    _
  $region5: #{_simple_model_jit.1} parent=0 // pred_fallthru
    _
  // Predicated region
  $region6: #{_simple_model_jit.1} parent=0 // pred_check
    _
  $region7: #{_simple_model_jit.1} parent=0 // pred_check_branch
    %20 = sbr.rel (0) target = $region9
  $region8: #{_simple_model_jit.1} parent=0 // pred_region
    _
  $region9: #{_simple_model_jit.1} parent=0 // pred_fallthru
    _
  // Predicated region
  $region10: #{_simple_model_jit.1} parent=0 // pred_check
    _
  $region11: #{_simple_model_jit.1} parent=0 // pred_check_branch
    %22 = sbr.rel (0) target = $region13
  $region12: #{_simple_model_jit.1} parent=0 // pred_region
    _
  $region13: #{_simple_model_jit.1} parent=0 // pred_fallthru
    _
  // Predicated region
  $region14: #{_simple_model_jit.1} parent=0 // pred_check
    _
  $region15: #{_simple_model_jit.1} parent=0 // pred_check_branch
    %24 = sbr.rel (0) target = $region17
  $region16: #{_simple_model_jit.1} parent=0 // pred_region
    _
  $region17: #{_simple_model_jit.1} parent=0 // pred_fallthru
    _
  // Predicated region
  $region18: #{_simple_model_jit.1} parent=0 // pred_check
    _
  $region19: #{_simple_model_jit.1} parent=0 // pred_check_branch
    %26 = sbr.rel (0) target = $region21
  $region20: #{_simple_model_jit.1} parent=0 // pred_region
    _
  $region21: #{_simple_model_jit.1} parent=0 // pred_fallthru
    _
  // Predicated region
  $region22: #{_simple_model_jit.1} parent=0 // pred_check
    _
  $region23: #{_simple_model_jit.1} parent=0 // pred_check_branch
    %28 = sbr.rel (0) target = $region25
  $region24: #{_simple_model_jit.1} parent=0 // pred_region
    _
  $region25: #{_simple_model_jit.1} parent=0 // pred_fallthru
    _
  // Predicated region
  $region26: #{_simple_model_jit.1} parent=0 // pred_check
    _
  $region27: #{_simple_model_jit.1} parent=0 // pred_check_branch
    %30 = sbr.rel (0) target = $region29
  $region28: #{_simple_model_jit.1} parent=0 // pred_region
    _
  $region29: #{_simple_model_jit.1} parent=0 // pred_fallthru
    _
  // Predicated region
  $region30: #{_simple_model_jit.1} parent=0 // pred_check
    _
  $region31: #{_simple_model_jit.1} parent=0 // pred_check_branch
    %32 = sbr.rel (0) target = $region33
  $region32: #{_simple_model_jit.1} parent=0 // pred_region
    _
  $region33: #{_simple_model_jit.1} parent=0 // pred_fallthru
    _
  // Predicated region
  $region34: #{_simple_model_jit.1} parent=0 // pred_check
    _
  $region35: #{_simple_model_jit.1} parent=0 // pred_check_branch
    %34 = sbr.rel (0) target = $region37
  $region36: #{_simple_model_jit.1} parent=0 // pred_region
    _
  $region37: #{_simple_model_jit.1} parent=0 // pred_fallthru
    _
  // Predicated region
  $region38: #{_simple_model_jit.1} parent=0 // pred_check
    _
  $region39: #{_simple_model_jit.1} parent=0 // pred_check_branch
    %36 = sbr.rel (0) target = $region41
  $region40: #{_simple_model_jit.1} parent=0 // pred_region
    _
  $region41: #{_simple_model_jit.1} parent=0 // pred_fallthru
    _
  %v37 = vld [vmem:[%s1] sm:$0xff]
  %v38 = vld [vmem:[%s1 + $0x8] sm:$0xff]
  %v39 = vld [vmem:[%s1 + $0x10] sm:$0xff]
  %v40 = vld [vmem:[%s1 + $0x18] sm:$0xff]
  %v41 = vld [vmem:[%s1 + $0x20] sm:$0xff]
  %v42 = vld [vmem:[%s1 + $0x28] sm:$0xff]
  %v43 = vld [vmem:[%s1 + $0x30] sm:$0xff]
  %v44 = vld [vmem:[%s1 + $0x38] sm:$0xff]
  %v45 = vld [vmem:[%s1 + $0x40] sm:$0x3]
  %v46 = vld [vmem:[%s0] sm:$0xff]
  %v47 = vld [vmem:[%s0 + $0x8] sm:$0xff]
  %v48 = vld [vmem:[%s0 + $0x10] sm:$0xff]
  %v49 = vld [vmem:[%s0 + $0x18] sm:$0xff]
  %v50 = vld [vmem:[%s0 + $0x20] sm:$0x3f]
  %vm51 = vcmask 310272
  %v53 = vsel %vm51, %v37, 0
  %v56 = vsel %vm51, %v38, 0
  %v59 = vsel %vm51, %v39, 0
  %v62 = vsel %vm51, %v40, 0
  %v65 = vsel %vm51, %v41, 0
  %v68 = vsel %vm51, %v42, 0
  %v71 = vsel %vm51, %v43, 0
  %v74 = vsel %vm51, %v44, 0
  %v77 = vsel %vm51, %v45, 0
  %vm79 = vcmask 1045504
  %v81 = vsel %vm79, %v50, 0
  %83 = vmatprep.subr.mxu0 0.0
  %84 = vmatpush1.msra.mxu0 %v46
  %85 = vmatprep.subr.mxu0 0.0
  %86 = vmatpush1.msra.mxu0 %v47
  %87 = vmatprep.subr.mxu0 0.0
  %88 = vmatpush1.msra.mxu0 %v48
  %89 = vmatprep.subr.mxu0 0.0
  %90 = vmatpush1.msra.mxu0 %v49
  %91 = vmatprep.subr.mxu0 0.0
  %92 = vmatpush1.msra.mxu0 %v81
  %93 = vmatprep.subr.mxu0 0.0
  %94 = vmatpush1.msra.mxu0 0.0
  %95 = vmatprep.subr.mxu0 0.0
  %96 = vmatpush1.msra.mxu0 0.0
  %97 = vmatprep.subr.mxu0 0.0
  %98 = vmatpush1.msra.mxu0 0.0
  %99 = vmatprep.subr.mxu0 0.0
  %100 = vmatpush1.msra.mxu0 0.0
  %101 = vmatprep.subr.mxu0 0.0
  %102 = vmatpush1.msra.mxu0 0.0
  %103 = vmatprep.subr.mxu0 0.0
  %104 = vmatpush1.msra.mxu0 0.0
  %105 = vmatprep.subr.mxu0 0.0
  %106 = vmatpush1.msra.mxu0 0.0
  %107 = vmatprep.subr.mxu0 0.0
  %108 = vmatpush1.msra.mxu0 0.0
  %109 = vmatprep.subr.mxu0 0.0
  %110 = vmatpush1.msra.mxu0 0.0
  %111 = vmatprep.subr.mxu0 0.0
  %112 = vmatpush1.msra.mxu0 0.0
  %113 = vmatprep.subr.mxu0 0.0
  %114 = vmatpush1.msra.mxu0 0.0
  %115 = vmatprep.subr.mxu0 0.0
  %116 = vmatpush1.msra.mxu0 0.0
  %117 = vmatprep.subr.mxu0 0.0
  %118 = vmatpush1.msra.mxu0 0.0
  %119 = vmatprep.subr.mxu0 0.0
  %120 = vmatpush1.msra.mxu0 0.0
  %121 = vmatprep.subr.mxu0 0.0
  %122 = vmatpush1.msra.mxu0 0.0
  %123 = vmatprep.subr.mxu0 0.0
  %124 = vmatpush1.msra.mxu0 0.0
  %125 = vmatprep.subr.mxu0 0.0
  %126 = vmatpush1.msra.mxu0 0.0
  %127 = vmatprep.subr.mxu0 0.0
  %128 = vmatpush1.msra.mxu0 0.0
  %129 = vmatprep.subr.mxu0 0.0
  %130 = vmatpush1.msra.mxu0 0.0
  %131 = vmatprep.subr.mxu0 0.0
  %132 = vmatpush1.msra.mxu0 0.0
  %133 = vmatprep.subr.mxu0 0.0
  %134 = vmatpush1.msra.mxu0 0.0
  %135 = vmatprep.subr.mxu0 0.0
  %136 = vmatpush1.msra.mxu0 0.0
  %137 = vmatprep.subr.mxu0 0.0
  %138 = vmatpush1.msra.mxu0 0.0
  %139 = vmatprep.subr.mxu0 0.0
  %140 = vmatpush1.msra.mxu0 0.0
  %141 = vmatprep.subr.mxu0 0.0
  %142 = vmatpush1.msra.mxu0 0.0
  %143 = vmatprep.subr.mxu0 0.0
  %144 = vmatpush1.msra.mxu0 0.0
  %145 = vmatprep.subr.mxu0 0.0
  %146 = vmatpush1.msra.mxu0 0.0
  %147 = vmatprep.mubr.f32.mxu0 0.0
  %148 = vmatmul.mubr.f32.gmra.mrb[0].mxu0 %v53
  %v149 = vpop.f32.mrb[0].mxu0
  %v150 = vadd.f32 0.0, %v149
  %v151 = vpop.f32.mrb[0].mxu0
  %152 = vmatprep.mubr.f32.mxu0 0.0
  %153 = vmatmul.mubr.f32.gmra.mrb[0].mxu0 %v56
  %v154 = vpop.f32.mrb[0].mxu0
  %v155 = vadd.f32 0.0, %v154
  %v156 = vpop.f32.mrb[0].mxu0
  %157 = vmatprep.mubr.f32.mxu0 0.0
  %158 = vmatmul.mubr.f32.gmra.mrb[0].mxu0 %v59
  %v159 = vpop.f32.mrb[0].mxu0
  %v160 = vadd.f32 0.0, %v159
  %v161 = vpop.f32.mrb[0].mxu0
  %162 = vmatprep.mubr.f32.mxu0 0.0
  %163 = vmatmul.mubr.f32.gmra.mrb[0].mxu0 %v62
  %v164 = vpop.f32.mrb[0].mxu0
  %v165 = vadd.f32 0.0, %v164
  %v166 = vpop.f32.mrb[0].mxu0
  %167 = vmatprep.mubr.f32.mxu0 0.0
  %168 = vmatmul.mubr.f32.gmra.mrb[0].mxu0 %v65
  %v169 = vpop.f32.mrb[0].mxu0
  %v170 = vadd.f32 0.0, %v169
  %v171 = vpop.f32.mrb[0].mxu0
  %172 = vmatprep.mubr.f32.mxu0 0.0
  %173 = vmatmul.mubr.f32.gmra.mrb[0].mxu0 %v68
  %v174 = vpop.f32.mrb[0].mxu0
  %v175 = vadd.f32 0.0, %v174
  %v176 = vpop.f32.mrb[0].mxu0
  %177 = vmatprep.mubr.f32.mxu0 0.0
  %178 = vmatmul.mubr.f32.gmra.mrb[0].mxu0 %v71
  %v179 = vpop.f32.mrb[0].mxu0
  %v180 = vadd.f32 0.0, %v179
  %v181 = vpop.f32.mrb[0].mxu0
  %182 = vmatprep.mubr.f32.mxu0 0.0
  %183 = vmatmul.mubr.f32.gmra.mrb[0].mxu0 %v74
  %v184 = vpop.f32.mrb[0].mxu0
  %v185 = vadd.f32 0.0, %v184
  %v186 = vpop.f32.mrb[0].mxu0
  %187 = vmatprep.mubr.f32.mxu0 0.0
  %188 = vmatmul.mubr.f32.gmra.mrb[0].mxu0 %v77
  %v189 = vpop.f32.mrb[0].mxu0
  %v190 = vadd.f32 0.0, %v189
  %v191 = vpop.f32.mrb[0].mxu0
  %192 = vdwg.mxu0
  %v193 = vmax.f32 %v150, 0.0
  %v194 = vmax.f32 %v155, 0.0
  %v195 = vmax.f32 %v160, 0.0
  %v196 = vmax.f32 %v165, 0.0
  %v197 = vmax.f32 %v170, 0.0
  %v198 = vmax.f32 %v175, 0.0
  %v199 = vmax.f32 %v180, 0.0
  %v200 = vmax.f32 %v185, 0.0
  %v201 = vmax.f32 %v190, 0.0
  %v202 = vld [vmem:[%s2] sm:$0xff]
  %v203 = vld [vmem:[%s2 + $0x8] sm:$0xff]
  %v204 = vld [vmem:[%s2 + $0x10] sm:$0xff]
  %v205 = vld [vmem:[%s2 + $0x18] sm:$0xff]
  %v206 = vld [vmem:[%s2 + $0x20] sm:$0xff]
  %v207 = vld [vmem:[%s2 + $0x28] sm:$0xff]
  %v208 = vld [vmem:[%s2 + $0x30] sm:$0xff]
  %v209 = vld [vmem:[%s2 + $0x38] sm:$0xff]
  %vm210 = vcmask 539648
  %v212 = vsel %vm210, %v202, 0
  %v215 = vsel %vm210, %v203, 0
  %v218 = vsel %vm210, %v204, 0
  %v221 = vsel %vm210, %v205, 0
  %v224 = vsel %vm210, %v206, 0
  %v227 = vsel %vm210, %v207, 0
  %v230 = vsel %vm210, %v208, 0
  %v233 = vsel %vm210, %v209, 0
  %vm235 = vcmask 1041408
  %v237 = vsel %vm235, %v201, 0
  %239 = vmatprep.subr.mxu0 0.0
  %240 = vmatpush1.msra.mxu0 %v193
  %241 = vmatprep.subr.mxu0 0.0
  %242 = vmatpush1.msra.mxu0 %v194
  %243 = vmatprep.subr.mxu0 0.0
  %244 = vmatpush1.msra.mxu0 %v195
  %245 = vmatprep.subr.mxu0 0.0
  %246 = vmatpush1.msra.mxu0 %v196
  %247 = vmatprep.subr.mxu0 0.0
  %248 = vmatpush1.msra.mxu0 %v197
  %249 = vmatprep.subr.mxu0 0.0
  %250 = vmatpush1.msra.mxu0 %v198
  %251 = vmatprep.subr.mxu0 0.0
  %252 = vmatpush1.msra.mxu0 %v199
  %253 = vmatprep.subr.mxu0 0.0
  %254 = vmatpush1.msra.mxu0 %v200
  %255 = vmatprep.subr.mxu0 0.0
  %256 = vmatpush1.msra.mxu0 %v237
  %257 = vmatprep.subr.mxu0 0.0
  %258 = vmatpush1.msra.mxu0 0.0
  %259 = vmatprep.subr.mxu0 0.0
  %260 = vmatpush1.msra.mxu0 0.0
  %261 = vmatprep.subr.mxu0 0.0
  %262 = vmatpush1.msra.mxu0 0.0
  %263 = vmatprep.subr.mxu0 0.0
  %264 = vmatpush1.msra.mxu0 0.0
  %265 = vmatprep.subr.mxu0 0.0
  %266 = vmatpush1.msra.mxu0 0.0
  %267 = vmatprep.subr.mxu0 0.0
  %268 = vmatpush1.msra.mxu0 0.0
  %269 = vmatprep.subr.mxu0 0.0
  %270 = vmatpush1.msra.mxu0 0.0
  %271 = vmatprep.subr.mxu0 0.0
  %272 = vmatpush1.msra.mxu0 0.0
  %273 = vmatprep.subr.mxu0 0.0
  %274 = vmatpush1.msra.mxu0 0.0
  %275 = vmatprep.subr.mxu0 0.0
  %276 = vmatpush1.msra.mxu0 0.0
  %277 = vmatprep.subr.mxu0 0.0
  %278 = vmatpush1.msra.mxu0 0.0
  %279 = vmatprep.subr.mxu0 0.0
  %280 = vmatpush1.msra.mxu0 0.0
  %281 = vmatprep.subr.mxu0 0.0
  %282 = vmatpush1.msra.mxu0 0.0
  %283 = vmatprep.subr.mxu0 0.0
  %284 = vmatpush1.msra.mxu0 0.0
  %285 = vmatprep.subr.mxu0 0.0
  %286 = vmatpush1.msra.mxu0 0.0
  %287 = vmatprep.subr.mxu0 0.0
  %288 = vmatpush1.msra.mxu0 0.0
  %289 = vmatprep.subr.mxu0 0.0
  %290 = vmatpush1.msra.mxu0 0.0
  %291 = vmatprep.subr.mxu0 0.0
  %292 = vmatpush1.msra.mxu0 0.0
  %293 = vmatprep.subr.mxu0 0.0
  %294 = vmatpush1.msra.mxu0 0.0
  %295 = vmatprep.subr.mxu0 0.0
  %296 = vmatpush1.msra.mxu0 0.0
  %297 = vmatprep.subr.mxu0 0.0
  %298 = vmatpush1.msra.mxu0 0.0
  %299 = vmatprep.subr.mxu0 0.0
  %300 = vmatpush1.msra.mxu0 0.0
  %301 = vmatprep.subr.mxu0 0.0
  %302 = vmatpush1.msra.mxu0 0.0
  %303 = vmatprep.mubr.f32.mxu0 0.0
  %304 = vmatmul.mubr.f32.gmra.mrb[0].mxu0 %v212
  %v305 = vpop.f32.mrb[0].mxu0
  %v306 = vadd.f32 0.0, %v305
  %v307 = vpop.f32.mrb[0].mxu0
  %308 = vmatprep.mubr.f32.mxu0 0.0
  %309 = vmatmul.mubr.f32.gmra.mrb[0].mxu0 %v215
  %v310 = vpop.f32.mrb[0].mxu0
  %v311 = vadd.f32 0.0, %v310
  %v312 = vpop.f32.mrb[0].mxu0
  %313 = vmatprep.mubr.f32.mxu0 0.0
  %314 = vmatmul.mubr.f32.gmra.mrb[0].mxu0 %v218
  %v315 = vpop.f32.mrb[0].mxu0
  %v316 = vadd.f32 0.0, %v315
  %v317 = vpop.f32.mrb[0].mxu0
  %318 = vmatprep.mubr.f32.mxu0 0.0
  %319 = vmatmul.mubr.f32.gmra.mrb[0].mxu0 %v221
  %v320 = vpop.f32.mrb[0].mxu0
  %v321 = vadd.f32 0.0, %v320
  %v322 = vpop.f32.mrb[0].mxu0
  %323 = vmatprep.mubr.f32.mxu0 0.0
  %324 = vmatmul.mubr.f32.gmra.mrb[0].mxu0 %v224
  %v325 = vpop.f32.mrb[0].mxu0
  %v326 = vadd.f32 0.0, %v325
  %v327 = vpop.f32.mrb[0].mxu0
  %328 = vmatprep.mubr.f32.mxu0 0.0
  %329 = vmatmul.mubr.f32.gmra.mrb[0].mxu0 %v227
  %v330 = vpop.f32.mrb[0].mxu0
  %v331 = vadd.f32 0.0, %v330
  %v332 = vpop.f32.mrb[0].mxu0
  %333 = vmatprep.mubr.f32.mxu0 0.0
  %334 = vmatmul.mubr.f32.gmra.mrb[0].mxu0 %v230
  %v335 = vpop.f32.mrb[0].mxu0
  %v336 = vadd.f32 0.0, %v335
  %v337 = vpop.f32.mrb[0].mxu0
  %338 = vmatprep.mubr.f32.mxu0 0.0
  %339 = vmatmul.mubr.f32.gmra.mrb[0].mxu0 %v233
  %v340 = vpop.f32.mrb[0].mxu0
  %v341 = vadd.f32 0.0, %v340
  %v342 = vpop.f32.mrb[0].mxu0
  %343 = vdwg.mxu0
  %vm344 = vcmp.eq.f32.partialorder %v201, 1.0
  %vm345 = vcmp.eq.f32.partialorder %v201, 2.0
  %v346 = vsel %vm345, 1, 0
  %v347 = vlaneseq
  %v348 = vshrl.u32 %v347, 7
  %v349 = vsub.s32 0, %v348
  %v350 = vrot.slane %v346, %v349
  %vm351 = vcmp.eq.s32.totalorder %v350, 1
  %v352 = vsel %vm351, %v316, %v326
  %v353 = vsel %vm351, %v321, %v331
  %v354 = vsel %vm344, 1, 0
  %v355 = vlaneseq
  %v356 = vshrl.u32 %v355, 7
  %v357 = vsub.s32 0, %v356
  %v358 = vrot.slane %v354, %v357
  %vm359 = vcmp.eq.s32.totalorder %v358, 1
  %v360 = vsel %vm359, %v306, %v352
  %v361 = vsel %vm359, %v311, %v353
  %v362 = vld [vmem:[%s3] sm:$0xff]
  %v363 = vld [vmem:[%s4] sm:$0xff]
  %vm364 = vcmask 130048
  %v366 = vsel %vm364, %v363, 0
  %368 = vmatprep.subr.mxu0 0.0
  %369 = vmatpush1.msra.mxu0 %v336
  %370 = vmatprep.subr.mxu0 0.0
  %371 = vmatpush1.msra.mxu0 %v341
  %372 = vmatprep.subr.mxu0 0.0
  %373 = vmatpush1.msra.mxu0 0.0
  %374 = vmatprep.subr.mxu0 0.0
  %375 = vmatpush1.msra.mxu0 0.0
  %376 = vmatprep.subr.mxu0 0.0
  %377 = vmatpush1.msra.mxu0 0.0
  %378 = vmatprep.subr.mxu0 0.0
  %379 = vmatpush1.msra.mxu0 0.0
  %380 = vmatprep.subr.mxu0 0.0
  %381 = vmatpush1.msra.mxu0 0.0
  %382 = vmatprep.subr.mxu0 0.0
  %383 = vmatpush1.msra.mxu0 0.0
  %384 = vmatprep.subr.mxu0 0.0
  %385 = vmatpush1.msra.mxu0 0.0
  %386 = vmatprep.subr.mxu0 0.0
  %387 = vmatpush1.msra.mxu0 0.0
  %388 = vmatprep.subr.mxu0 0.0
  %389 = vmatpush1.msra.mxu0 0.0
  %390 = vmatprep.subr.mxu0 0.0
  %391 = vmatpush1.msra.mxu0 0.0
  %392 = vmatprep.subr.mxu0 0.0
  %393 = vmatpush1.msra.mxu0 0.0
  %394 = vmatprep.subr.mxu0 0.0
  %395 = vmatpush1.msra.mxu0 0.0
  %396 = vmatprep.subr.mxu0 0.0
  %397 = vmatpush1.msra.mxu0 0.0
  %398 = vmatprep.subr.mxu0 0.0
  %399 = vmatpush1.msra.mxu0 0.0
  %400 = vmatprep.subr.mxu0 0.0
  %401 = vmatpush1.msra.mxu0 0.0
  %402 = vmatprep.subr.mxu0 0.0
  %403 = vmatpush1.msra.mxu0 0.0
  %404 = vmatprep.subr.mxu0 0.0
  %405 = vmatpush1.msra.mxu0 0.0
  %406 = vmatprep.subr.mxu0 0.0
  %407 = vmatpush1.msra.mxu0 0.0
  %408 = vmatprep.subr.mxu0 0.0
  %409 = vmatpush1.msra.mxu0 0.0
  %410 = vmatprep.subr.mxu0 0.0
  %411 = vmatpush1.msra.mxu0 0.0
  %412 = vmatprep.subr.mxu0 0.0
  %413 = vmatpush1.msra.mxu0 0.0
  %414 = vmatprep.subr.mxu0 0.0
  %415 = vmatpush1.msra.mxu0 0.0
  %416 = vmatprep.subr.mxu0 0.0
  %417 = vmatpush1.msra.mxu0 0.0
  %418 = vmatprep.subr.mxu0 0.0
  %419 = vmatpush1.msra.mxu0 0.0
  %420 = vmatprep.subr.mxu0 0.0
  %421 = vmatpush1.msra.mxu0 0.0
  %422 = vmatprep.subr.mxu0 0.0
  %423 = vmatpush1.msra.mxu0 0.0
  %424 = vmatprep.subr.mxu0 0.0
  %425 = vmatpush1.msra.mxu0 0.0
  %426 = vmatprep.subr.mxu0 0.0
  %427 = vmatpush1.msra.mxu0 0.0
  %428 = vmatprep.subr.mxu0 0.0
  %429 = vmatpush1.msra.mxu0 0.0
  %430 = vmatprep.subr.mxu0 0.0
  %431 = vmatpush1.msra.mxu0 0.0
  %432 = vmatprep.mubr.f32.mxu0 0.0
  %433 = vmatmul.mubr.f32.gmra.mrb[0].mxu0 %v366
  %v434 = vpop.f32.mrb[0].mxu0
  %v435 = vadd.f32 0.0, %v434
  %v436 = vpop.f32.mrb[0].mxu0
  %437 = vdwg.mxu0
  %v439 = vsel %vm364, %v362, 0
  %441 = vmatprep.subr.mxu0 0.0
  %442 = vmatpush1.msra.mxu0 %v360
  %443 = vmatprep.subr.mxu0 0.0
  %444 = vmatpush1.msra.mxu0 %v361
  %445 = vmatprep.subr.mxu0 0.0
  %446 = vmatpush1.msra.mxu0 0.0
  %447 = vmatprep.subr.mxu0 0.0
  %448 = vmatpush1.msra.mxu0 0.0
  %449 = vmatprep.subr.mxu0 0.0
  %450 = vmatpush1.msra.mxu0 0.0
  %451 = vmatprep.subr.mxu0 0.0
  %452 = vmatpush1.msra.mxu0 0.0
  %453 = vmatprep.subr.mxu0 0.0
  %454 = vmatpush1.msra.mxu0 0.0
  %455 = vmatprep.subr.mxu0 0.0
  %456 = vmatpush1.msra.mxu0 0.0
  %457 = vmatprep.subr.mxu0 0.0
  %458 = vmatpush1.msra.mxu0 0.0
  %459 = vmatprep.subr.mxu0 0.0
  %460 = vmatpush1.msra.mxu0 0.0
  %461 = vmatprep.subr.mxu0 0.0
  %462 = vmatpush1.msra.mxu0 0.0
  %463 = vmatprep.subr.mxu0 0.0
  %464 = vmatpush1.msra.mxu0 0.0
  %465 = vmatprep.subr.mxu0 0.0
  %466 = vmatpush1.msra.mxu0 0.0
  %467 = vmatprep.subr.mxu0 0.0
  %468 = vmatpush1.msra.mxu0 0.0
  %469 = vmatprep.subr.mxu0 0.0
  %470 = vmatpush1.msra.mxu0 0.0
  %471 = vmatprep.subr.mxu0 0.0
  %472 = vmatpush1.msra.mxu0 0.0
  %473 = vmatprep.subr.mxu0 0.0
  %474 = vmatpush1.msra.mxu0 0.0
  %475 = vmatprep.subr.mxu0 0.0
  %476 = vmatpush1.msra.mxu0 0.0
  %477 = vmatprep.subr.mxu0 0.0
  %478 = vmatpush1.msra.mxu0 0.0
  %479 = vmatprep.subr.mxu0 0.0
  %480 = vmatpush1.msra.mxu0 0.0
  %481 = vmatprep.subr.mxu0 0.0
  %482 = vmatpush1.msra.mxu0 0.0
  %483 = vmatprep.subr.mxu0 0.0
  %484 = vmatpush1.msra.mxu0 0.0
  %485 = vmatprep.subr.mxu0 0.0
  %486 = vmatpush1.msra.mxu0 0.0
  %487 = vmatprep.subr.mxu0 0.0
  %488 = vmatpush1.msra.mxu0 0.0
  %489 = vmatprep.subr.mxu0 0.0
  %490 = vmatpush1.msra.mxu0 0.0
  %491 = vmatprep.subr.mxu0 0.0
  %492 = vmatpush1.msra.mxu0 0.0
  %493 = vmatprep.subr.mxu0 0.0
  %494 = vmatpush1.msra.mxu0 0.0
  %495 = vmatprep.subr.mxu0 0.0
  %496 = vmatpush1.msra.mxu0 0.0
  %497 = vmatprep.subr.mxu0 0.0
  %498 = vmatpush1.msra.mxu0 0.0
  %499 = vmatprep.subr.mxu0 0.0
  %500 = vmatpush1.msra.mxu0 0.0
  %501 = vmatprep.subr.mxu0 0.0
  %502 = vmatpush1.msra.mxu0 0.0
  %503 = vmatprep.subr.mxu0 0.0
  %504 = vmatpush1.msra.mxu0 0.0
  %505 = vmatprep.mubr.f32.mxu0 0.0
  %506 = vmatmul.mubr.f32.gmra.mrb[0].mxu0 %v439
  %v507 = vpop.f32.mrb[0].mxu0
  %v508 = vadd.f32 %v435, %v507
  %v509 = vpop.f32.mrb[0].mxu0
  %510 = vdwg.mxu0
  %v511 = vld [vmem:[%s5] sm:$0xff]
  %513 = vset.pattern.permute.xlu0 0
  %514 = vperm.xlu0 %513, %v511
  %v515 = vpop.permute.xlu0 %514
  %v517 = vadd.f32 %v508, %v515
  %v518 = vmax.f32 %v517, 0.0
  %v519 = vld [vmem:[%s6] sm:$0xf]
  %v520 = vld [vmem:[%s7] sm:$0xf]
  %522 = vset.pattern.permute.xlu0 0
  %523 = vperm.xlu0 %522, %v520
  %v524 = vpop.permute.xlu0 %523
  %vm526 = vcmask 64512
  %v528 = vsel %vm526, %v519, 0
  %530 = vmatprep.subr.mxu0 0.0
  %531 = vmatpush1.msra.mxu0 %v518
  %532 = vmatprep.subr.mxu0 0.0
  %533 = vmatpush1.msra.mxu0 0.0
  %534 = vmatprep.subr.mxu0 0.0
  %535 = vmatpush1.msra.mxu0 0.0
  %536 = vmatprep.subr.mxu0 0.0
  %537 = vmatpush1.msra.mxu0 0.0
  %538 = vmatprep.subr.mxu0 0.0
  %539 = vmatpush1.msra.mxu0 0.0
  %540 = vmatprep.subr.mxu0 0.0
  %541 = vmatpush1.msra.mxu0 0.0
  %542 = vmatprep.subr.mxu0 0.0
  %543 = vmatpush1.msra.mxu0 0.0
  %544 = vmatprep.subr.mxu0 0.0
  %545 = vmatpush1.msra.mxu0 0.0
  %546 = vmatprep.subr.mxu0 0.0
  %547 = vmatpush1.msra.mxu0 0.0
  %548 = vmatprep.subr.mxu0 0.0
  %549 = vmatpush1.msra.mxu0 0.0
  %550 = vmatprep.subr.mxu0 0.0
  %551 = vmatpush1.msra.mxu0 0.0
  %552 = vmatprep.subr.mxu0 0.0
  %553 = vmatpush1.msra.mxu0 0.0
  %554 = vmatprep.subr.mxu0 0.0
  %555 = vmatpush1.msra.mxu0 0.0
  %556 = vmatprep.subr.mxu0 0.0
  %557 = vmatpush1.msra.mxu0 0.0
  %558 = vmatprep.subr.mxu0 0.0
  %559 = vmatpush1.msra.mxu0 0.0
  %560 = vmatprep.subr.mxu0 0.0
  %561 = vmatpush1.msra.mxu0 0.0
  %562 = vmatprep.subr.mxu0 0.0
  %563 = vmatpush1.msra.mxu0 0.0
  %564 = vmatprep.subr.mxu0 0.0
  %565 = vmatpush1.msra.mxu0 0.0
  %566 = vmatprep.subr.mxu0 0.0
  %567 = vmatpush1.msra.mxu0 0.0
  %568 = vmatprep.subr.mxu0 0.0
  %569 = vmatpush1.msra.mxu0 0.0
  %570 = vmatprep.subr.mxu0 0.0
  %571 = vmatpush1.msra.mxu0 0.0
  %572 = vmatprep.subr.mxu0 0.0
  %573 = vmatpush1.msra.mxu0 0.0
  %574 = vmatprep.subr.mxu0 0.0
  %575 = vmatpush1.msra.mxu0 0.0
  %576 = vmatprep.subr.mxu0 0.0
  %577 = vmatpush1.msra.mxu0 0.0
  %578 = vmatprep.subr.mxu0 0.0
  %579 = vmatpush1.msra.mxu0 0.0
  %580 = vmatprep.subr.mxu0 0.0
  %581 = vmatpush1.msra.mxu0 0.0
  %582 = vmatprep.subr.mxu0 0.0
  %583 = vmatpush1.msra.mxu0 0.0
  %584 = vmatprep.subr.mxu0 0.0
  %585 = vmatpush1.msra.mxu0 0.0
  %586 = vmatprep.subr.mxu0 0.0
  %587 = vmatpush1.msra.mxu0 0.0
  %588 = vmatprep.subr.mxu0 0.0
  %589 = vmatpush1.msra.mxu0 0.0
  %590 = vmatprep.subr.mxu0 0.0
  %591 = vmatpush1.msra.mxu0 0.0
  %592 = vmatprep.subr.mxu0 0.0
  %593 = vmatpush1.msra.mxu0 0.0
  %594 = vmatprep.mubr.f32.mxu0 0.0
  %595 = vmatmul.mubr.f32.gmra.mrb[0].mxu0 %v528
  %v596 = vpop.f32.mrb[0].mxu0
  %v597 = vadd.f32 %v524, %v596
  %v598 = vpop.f32.mrb[0].mxu0
  %599 = vdwg.mxu0
  %v600 = vmax.f32 %v597, 0.0
  %v601 = vld [vmem:[%s8] sm:$0x1]
  %603 = vset.pattern.permute.xlu0 0
  %604 = vperm.xlu0 %603, %v601
  %v605 = vpop.permute.xlu0 %604
  %v607 = vlaneseq
  %v608 = vshrl.u32 %v607, 7
  %v609 = vsub.s32 0, %v608
  %v610 = vrot.slane %v605, %v609
  %v611 = vmul.f32 %v600, %v610
  %612 = vset.pattern.permute.xlu0 1
  %613 = vperm.xlu0 %612, %v601
  %v614 = vpop.permute.xlu0 %613
  %v616 = vlaneseq
  %v617 = vshrl.u32 %v616, 7
  %v618 = vsub.s32 0, %v617
  %v619 = vrot.slane %v614, %v618
  %v620 = vmul.f32 %v600, %v619
  %v622 = vrot.slane %v620, 1
  %v624 = vadd.f32 %v611, %v622
  %625 = vset.pattern.permute.xlu0 2
  %626 = vperm.xlu0 %625, %v601
  %v627 = vpop.permute.xlu0 %626
  %v629 = vlaneseq
  %v630 = vshrl.u32 %v629, 7
  %v631 = vsub.s32 0, %v630
  %v632 = vrot.slane %v627, %v631
  %v633 = vmul.f32 %v600, %v632
  %v635 = vrot.slane %v633, 2
  %v637 = vadd.f32 %v624, %v635
  %638 = vset.pattern.permute.xlu0 3
  %639 = vperm.xlu0 %638, %v601
  %v640 = vpop.permute.xlu0 %639
  %v642 = vlaneseq
  %v643 = vshrl.u32 %v642, 7
  %v644 = vsub.s32 0, %v643
  %v645 = vrot.slane %v640, %v644
  %v646 = vmul.f32 %v600, %v645
  %v648 = vrot.slane %v646, 3
  %v650 = vadd.f32 %v637, %v648
  %v651 = vld [vmem:[#allocation2] sm:$0x1]
  %653 = vset.pattern.permute.xlu0 0
  %654 = vperm.xlu0 %653, %v651
  %v655 = vpop.permute.xlu0 %654
  %v657 = vlaneseq
  %v658 = vshrl.u32 %v657, 7
  %v659 = vsub.s32 0, %v658
  %v660 = vrot.slane %v655, %v659
  %v661 = vadd.f32 %v650, %v660
  %662 = vst [vmem:[%s10] sm:$0x1] %v661
  // Predicated region
  $region42: #{_simple_model_jit.1} parent=0 // pred_check
    _
  $region43: #{_simple_model_jit.1} parent=0 // pred_check_branch
    %664 = sbr.rel (0) target = $region45
  $region44: #{_simple_model_jit.1} parent=0 // pred_region
    _
  $region45: #{_simple_model_jit.1} parent=0 // pred_fallthru
    _
  // Predicated region
  $region46: #{_simple_model_jit.1} parent=0 // pred_check
    _
  $region47: #{_simple_model_jit.1} parent=0 // pred_check_branch
    %666 = sbr.rel (0) target = $region49
  $region48: #{_simple_model_jit.1} parent=0 // pred_region
    _
  $region49: #{_simple_model_jit.1} parent=0 // pred_fallthru
    _

</llo_original>
